<compile_context>
chip_gen: v5e
topology: v5e:2x2
jax: 0.10.0
libtpu: 0.0.40
codegen_flags: <defaults>
</compile_context>

<pallas_src>
import functools

import jax
import jax.numpy as jnp
from jax import lax
from jax.experimental import pallas as pl
from jax.experimental.pallas import tpu as pltpu

_MiB = 1 << 20


def _round_up(x, m):
    return ((x + m - 1) // m) * m


def _vmem_capacity_bytes():
    try:
        cap = int(pltpu.get_tpu_info().vmem_capacity_bytes)
        if cap > 0:
            return cap
    except Exception:
        pass
    return 64 * _MiB  # conservative (v7x-sized) fallback


# --------------------------------------------------------------------------
# Kernels
# --------------------------------------------------------------------------
def _time_mean_mlp_kernel(z_ref, w1_ref, b1_ref, w2_ref, b2_ref, out_ref, acc_ref,
                          *, inv_t, t_blk, t_total, mask_t):
    """Grid = (batch blocks ["parallel"], T tiles ["arbitrary", innermost]).

    z_ref:  (B_blk, T_blk, C)    input tile, native dtype (f32 / bf16)
    w1_ref: (C, H_pad),   b1_ref: (1, H_pad)
    w2_ref: (H_pad, S_pad), b2_ref: (1, S_pad)
    out_ref: (B_blk, S_pad) f32  lane-dense logits block
    acc_ref: (B_blk, C) f32      running time-sum accumulator (scratch)

    NOTE: the accumulator-in-scratch pattern is only correct while the T axis
    is the *innermost* grid axis with the batch axis outside it.
    """
    ti = pl.program_id(1)

    @pl.when(ti == 0)
    def _init():
        acc_ref[...] = jnp.zeros_like(acc_ref)

    zt = z_ref[...].astype(jnp.float32)
    if mask_t:
        # Last T tile sticks out past T: zero the out-of-range rows (their
        # VMEM contents are unspecified garbage).
        t_idx = lax.broadcasted_iota(jnp.int32, zt.shape[1:], 0) + ti * t_blk
        zt = jnp.where(t_idx[None, :, :] < t_total, zt, 0.0)
    acc_ref[...] += jnp.sum(zt, axis=1)

    @pl.when(ti == pl.num_programs(1) - 1)
    def _finalize():
        z_c = acc_ref[...] * inv_t                                   # mean over time
        h = jnp.dot(z_c, w1_ref[...], preferred_element_type=jnp.float32) + b1_ref[...]
        h = jnp.maximum(h, 0.2 * h)                                  # LeakyReLU(0.2)
        out = jnp.dot(h, w2_ref[...], preferred_element_type=jnp.float32) + b2_ref[...]
        out_ref[...] = out.astype(out_ref.dtype)


def _mlp_kernel(z_ref, w1_ref, b1_ref, w2_ref, b2_ref, out_ref):
    """2-D / T==1 path: no time-mean, straight through the MLP."""
    z_c = z_ref[...].astype(jnp.float32)
    h = jnp.dot(z_c, w1_ref[...], preferred_element_type=jnp.float32) + b1_ref[...]
    h = jnp.maximum(h, 0.2 * h)
    out = jnp.dot(h, w2_ref[...], preferred_element_type=jnp.float32) + b2_ref[...]
    out_ref[...] = out.astype(out_ref.dtype)


# --------------------------------------------------------------------------
# Wrappers
# --------------------------------------------------------------------------
def _pad_params(w1, b1, w2, b2):
    C, H = w1.shape
    S = w2.shape[1]
    H_pad = _round_up(H, 128)
    S_pad = _round_up(S, 128)
    f32 = jnp.float32
    w1p = jnp.pad(w1.astype(f32), ((0, 0), (0, H_pad - H)))
    b1p = jnp.pad(b1.astype(f32), ((0, H_pad - H),)).reshape(1, H_pad)
    w2p = jnp.pad(w2.astype(f32), ((0, H_pad - H), (0, S_pad - S)))
    b2p = jnp.pad(b2.astype(f32), ((0, S_pad - S),)).reshape(1, S_pad)
    return w1p, b1p, w2p, b2p, H_pad, S_pad


def _weight_bytes(C, H_pad, S_pad):
    return 4 * (C * H_pad + H_pad + H_pad * S_pad + S_pad)


def _mlp_2d(z2, w1p, b1p, w2p, b2p, H_pad, S_pad, vmem_cap):
    B, C = z2.shape
    B_blk = min(_round_up(B, 8), 256)
    grid = (pl.cdiv(B, B_blk),)

    need = (2 * B_blk * C * z2.dtype.itemsize
            + 2 * _weight_bytes(C, H_pad, S_pad)
            + 2 * 4 * B_blk * S_pad)
    vmem_limit = int(min(vmem_cap, max(2 * need, 16 * _MiB)))

    return pl.pallas_call(
        _mlp_kernel,
        out_shape=jax.ShapeDtypeStruct((B, S_pad), jnp.float32),
        grid_spec=pltpu.PrefetchScalarGridSpec(
            num_scalar_prefetch=0,
            grid=grid,
            in_specs=[
                pl.BlockSpec((B_blk, C), lambda bi: (bi, 0)),
                pl.BlockSpec((C, H_pad), lambda bi: (0, 0)),
                pl.BlockSpec((1, H_pad), lambda bi: (0, 0)),
                pl.BlockSpec((H_pad, S_pad), lambda bi: (0, 0)),
                pl.BlockSpec((1, S_pad), lambda bi: (0, 0)),
            ],
            out_specs=pl.BlockSpec((B_blk, S_pad), lambda bi: (bi, 0)),
        ),
        compiler_params=pltpu.CompilerParams(
            dimension_semantics=("parallel",),
            vmem_limit_bytes=vmem_limit,
        ),
    )(z2, w1p, b1p, w2p, b2p)


def _time_mean_mlp(z3, w1p, b1p, w2p, b2p, H_pad, S_pad, vmem_cap, t_block):
    B, T, C = z3.shape
    z_item = z3.dtype.itemsize

    # Per-buffer streaming-tile budget: big tiles amortize per-grid-step
    # overhead on 128-MiB-VMEM parts; stay conservative on v7x (64 MiB).
    per_buf_budget = 16 * _MiB if vmem_cap >= 96 * _MiB else 6 * _MiB

    B_blk = min(_round_up(B, 8), 128)
    # Shrink the batch block *before* clamping the T tile to its 8-row
    # minimum so a minimal tile can never silently exceed the budget.
    while B_blk > 8 and B_blk * 8 * C * z_item > per_buf_budget:
        B_blk = max(8, B_blk // 2)

    if t_block is not None:
        T_blk = _round_up(max(1, int(t_block)), 8)
    else:
        rows = per_buf_budget // max(1, B_blk * C * z_item)
        T_blk = max(8, (rows // 8) * 8)
    if T_blk >= T:
        T_blk = T            # single tile covering the full (unpadded) T; no mask
    n_t = pl.cdiv(T, T_blk)
    mask_t = (T % T_blk) != 0

    z_tile_bytes = B_blk * T_blk * C * z_item
    need = (2 * z_tile_bytes
            + 2 * _weight_bytes(C, H_pad, S_pad)
            + 2 * 4 * B_blk * S_pad
            + 4 * B_blk * C)
    vmem_limit = int(min(vmem_cap, max(2 * need, 16 * _MiB)))

    kernel = functools.partial(
        _time_mean_mlp_kernel,
        inv_t=1.0 / float(T), t_blk=T_blk, t_total=T, mask_t=mask_t)

    # T MUST remain the innermost ("arbitrary") grid axis for the accumulator.
    grid = (pl.cdiv(B, B_blk), n_t)

    return pl.pallas_call(
        kernel,
        out_shape=jax.ShapeDtypeStruct((B, S_pad), jnp.float32),
        grid_spec=pltpu.PrefetchScalarGridSpec(
            num_scalar_prefetch=0,
            grid=grid,
            in_specs=[
                pl.BlockSpec((B_blk, T_blk, C), lambda bi, ti: (bi, ti, 0)),
                pl.BlockSpec((C, H_pad), lambda bi, ti: (0, 0)),
                pl.BlockSpec((1, H_pad), lambda bi, ti: (0, 0)),
                pl.BlockSpec((H_pad, S_pad), lambda bi, ti: (0, 0)),
                pl.BlockSpec((1, S_pad), lambda bi, ti: (0, 0)),
            ],
            out_specs=pl.BlockSpec((B_blk, S_pad), lambda bi, ti: (bi, 0)),
            scratch_shapes=[pltpu.VMEM((B_blk, C), jnp.float32)],
        ),
        compiler_params=pltpu.CompilerParams(
            dimension_semantics=("parallel", "arbitrary"),
            vmem_limit_bytes=vmem_limit,
        ),
    )(z3, w1p, b1p, w2p, b2p)


def latent_mlp_discriminator(z_content, w1, b1, w2, b2, *, t_block=None):
    """Forward pass of LatentMLPDiscriminator.

    z_content: (B, T, C) or (B, C); float32 or bfloat16 (streamed as-is).
    w1: (C, 128), b1: (128,), w2: (128, num_speakers), b2: (num_speakers,)
      (weights stored transposed w.r.t. torch.nn.Linear so the kernel computes
       x @ W + b directly on the MXU).
    Returns float32 logits of shape (B, num_speakers).
    """
    C, H = w1.shape
    S = w2.shape[1]
    assert w2.shape[0] == H and b1.shape == (H,) and b2.shape == (S,)

    w1p, b1p, w2p, b2p, H_pad, S_pad = _pad_params(w1, b1, w2, b2)
    vmem_cap = _vmem_capacity_bytes()

    if z_content.ndim == 2:
        assert z_content.shape[1] == C
        out = _mlp_2d(z_content, w1p, b1p, w2p, b2p, H_pad, S_pad, vmem_cap)
    elif z_content.ndim == 3:
        assert z_content.shape[2] == C
        if z_content.shape[1] == 1:       # mean over a single frame == identity
            out = _mlp_2d(z_content[:, 0, :], w1p, b1p, w2p, b2p, H_pad, S_pad, vmem_cap)
        else:
            out = _time_mean_mlp(z_content, w1p, b1p, w2p, b2p, H_pad, S_pad,
                                 vmem_cap, t_block)
    else:
        raise ValueError("z_content must be 2-D (B, C) or 3-D (B, T, C)")

    return out[:, :S]


# --------------------------------------------------------------------------
# Reference + test driver
# --------------------------------------------------------------------------
def init_params(key, content_dim, num_speakers, hidden=128):
    """Deterministic synthetic init (uniform, roughly matching nn.Linear scale)."""
    k1, k2, k3, k4 = jax.random.split(key, 4)
    lim1 = 1.0 / jnp.sqrt(content_dim)
    lim2 = 1.0 / jnp.sqrt(hidden)
    w1 = jax.random.uniform(k1, (content_dim, hidden), jnp.float32, -lim1, lim1)
    b1 = jax.random.uniform(k2, (hidden,), jnp.float32, -lim1, lim1)
    w2 = jax.random.uniform(k3, (hidden, num_speakers), jnp.float32, -lim2, lim2)
    b2 = jax.random.uniform(k4, (num_speakers,), jnp.float32, -lim2, lim2)
    return w1, b1, w2, b2


def _reference(z_content, w1, b1, w2, b2):
    z = z_content
    if z.ndim == 3:
        z = z.mean(axis=1)
    h = z @ w1 + b1
    h = jnp.where(h > 0, h, 0.2 * h)
    return h @ w2 + b2


if __name__ == "__main__":
    B, T, content_dim, num_speakers = 2, 8, 32, 10

    key = jax.random.PRNGKey(0)
    k_z, k_p = jax.random.split(key)
    z_content = jax.random.normal(k_z, (B, T, content_dim), jnp.float32)
    w1, b1, w2, b2 = init_params(k_p, content_dim, num_speakers)

    # Main small-shape run (single grid step).
    out = jax.block_until_ready(latent_mlp_discriminator(z_content, w1, b1, w2, b2))
    ref = _reference(z_content, w1, b1, w2, b2)
    assert out.shape == (B, num_speakers)
    assert jnp.allclose(out, ref, atol=1e-4, rtol=1e-4)

    # Multi-tile T accumulator path with a ragged last tile (in-kernel T mask)
    # and a ragged batch block (B=3 with B_blk=8 -> masked edge-output store).
    z_rag = jax.random.normal(jax.random.PRNGKey(1), (3, 13, content_dim), jnp.float32)
    out_rag = jax.block_until_ready(
        latent_mlp_discriminator(z_rag, w1, b1, w2, b2, t_block=8))
    assert jnp.allclose(out_rag, _reference(z_rag, w1, b1, w2, b2), atol=1e-4, rtol=1e-4)

    # bf16 activations streamed in native dtype (kernel upcasts per tile).
    z_bf16 = jax.random.normal(
        jax.random.PRNGKey(2), (2, 40, content_dim), jnp.float32).astype(jnp.bfloat16)
    out_bf = jax.block_until_ready(
        latent_mlp_discriminator(z_bf16, w1, b1, w2, b2, t_block=8))
    ref_bf = _reference(z_bf16.astype(jnp.float32), w1, b1, w2, b2)
    assert jnp.allclose(out_bf, ref_bf, atol=1e-3, rtol=1e-3)

    # 2-D input path (no time mean, dedicated single-phase kernel).
    z2d = z_content[:, 0, :]
    out2d = jax.block_until_ready(latent_mlp_discriminator(z2d, w1, b1, w2, b2))
    assert jnp.allclose(out2d, _reference(z2d, w1, b1, w2, b2), atol=1e-4, rtol=1e-4)

    print("KERNEL_OK")
</pallas_src>

<mosaic_0001>
module attributes {stable_mosaic.version = 11 : i64} {
  func.func @_time_mean_mlp_kernel(%arg0: i32, %arg1: i32, %arg2: memref<8x8x32xf32, #tpu.memory_space<vmem>>, %arg3: memref<32x128xf32, #tpu.memory_space<vmem>>, %arg4: memref<1x128xf32, #tpu.memory_space<vmem>>, %arg5: memref<128x128xf32, #tpu.memory_space<vmem>>, %arg6: memref<1x128xf32, #tpu.memory_space<vmem>>, %arg7: memref<8x128xf32, #tpu.memory_space<vmem>>, %arg8: memref<8x32xf32, #tpu.memory_space<vmem>>) attributes {dimension_semantics = [#tpu.dimension_semantics<parallel>, #tpu.dimension_semantics<arbitrary>], iteration_bounds = array<i64: 1, 1>, scalar_prefetch = 0 : i64, scratch_operands = 1 : i64, tpu.core_type = #tpu.core_type<tc>, window_params = [{transform_indices = @transform_0, window_bounds = array<i64: 8, 8, 32>}, {pipeline_mode = #tpu.pipeline_mode<synchronous>, transform_indices = @transform_1, window_bounds = array<i64: 32, 128>}, {pipeline_mode = #tpu.pipeline_mode<synchronous>, transform_indices = @transform_2, window_bounds = array<i64: 1, 128>}, {pipeline_mode = #tpu.pipeline_mode<synchronous>, transform_indices = @transform_3, window_bounds = array<i64: 128, 128>}, {pipeline_mode = #tpu.pipeline_mode<synchronous>, transform_indices = @transform_4, window_bounds = array<i64: 1, 128>}, {transform_indices = @transform_5, window_bounds = array<i64: 8, 128>}]} {
    %c0_i32 = arith.constant 0 : i32
    %0 = arith.cmpi eq, %arg1, %c0_i32 : i32
    %1 = arith.extui %0 : i1 to i32
    %c0_i32_0 = arith.constant 0 : i32
    %2 = arith.cmpi ne, %1, %c0_i32_0 : i32
    scf.if %2 {
      %cst_9 = arith.constant 0.000000e+00 : f32
      %11 = vector.broadcast %cst_9 : f32 to vector<8x32xf32>
      %c0_10 = arith.constant 0 : index
      %c0_11 = arith.constant 0 : index
      %12 = vector.load %arg8[%c0_10, %c0_11] : memref<8x32xf32, #tpu.memory_space<vmem>>, vector<8x32xf32>
      tpu.vector_store %arg8[%c0_10, %c0_11], %11 {strides = array<i32>} : memref<8x32xf32, #tpu.memory_space<vmem>>, vector<8x32xf32>,
    } else {
    }
    %c0 = arith.constant 0 : index
    %c0_1 = arith.constant 0 : index
    %c0_2 = arith.constant 0 : index
    %3 = vector.load %arg2[%c0, %c0_1, %c0_2] : memref<8x8x32xf32, #tpu.memory_space<vmem>>, vector<8x8x32xf32>
    %c0_3 = arith.constant 0 : index
    %c0_4 = arith.constant 0 : index
    %4 = vector.load %arg8[%c0_3, %c0_4] : memref<8x32xf32, #tpu.memory_space<vmem>>, vector<8x32xf32>
    %cst = arith.constant dense<0.000000e+00> : vector<8x32xf32>
    %5 = vector.multi_reduction <add>, %3, %cst [1] : vector<8x8x32xf32> to vector<8x32xf32>
    %6 = arith.addf %4, %5 : vector<8x32xf32>
    %c0_5 = arith.constant 0 : index
    %c0_6 = arith.constant 0 : index
    %7 = vector.load %arg8[%c0_5, %c0_6] : memref<8x32xf32, #tpu.memory_space<vmem>>, vector<8x32xf32>
    tpu.vector_store %arg8[%c0_5, %c0_6], %6 {strides = array<i32>} : memref<8x32xf32, #tpu.memory_space<vmem>>, vector<8x32xf32>,
    %c0_i32_7 = arith.constant 0 : i32
    %8 = arith.cmpi eq, %arg1, %c0_i32_7 : i32
    %9 = arith.extui %8 : i1 to i32
    %c0_i32_8 = arith.constant 0 : i32
    %10 = arith.cmpi ne, %9, %c0_i32_8 : i32
    scf.if %10 {
      %c0_9 = arith.constant 0 : index
      %c0_10 = arith.constant 0 : index
      %11 = vector.load %arg8[%c0_9, %c0_10] : memref<8x32xf32, #tpu.memory_space<vmem>>, vector<8x32xf32>
      %cst_11 = arith.constant 1.250000e-01 : f32
      %12 = vector.broadcast %cst_11 : f32 to vector<8x32xf32>
      %13 = arith.mulf %11, %12 : vector<8x32xf32>
      %c0_12 = arith.constant 0 : index
      %c0_13 = arith.constant 0 : index
      %14 = vector.load %arg3[%c0_12, %c0_13] : memref<32x128xf32, #tpu.memory_space<vmem>>, vector<32x128xf32>
      %cst_14 = arith.constant dense<0.000000e+00> : vector<8x128xf32>
      %15 = tpu.matmul %13, %14, %cst_14 {dimension_numbers = #tpu.dot_dimension_numbers<[1], [0], [0], [1], [0, 0, 1, 1], [], []>} : vector<8x32xf32>, vector<32x128xf32>, vector<8x128xf32> -> vector<8x128xf32>
      %c0_15 = arith.constant 0 : index
      %c0_16 = arith.constant 0 : index
      %16 = vector.load %arg4[%c0_15, %c0_16] : memref<1x128xf32, #tpu.memory_space<vmem>>, vector<1x128xf32>
      %17 = vector.broadcast %16 : vector<1x128xf32> to vector<8x128xf32>
      %18 = arith.addf %15, %17 : vector<8x128xf32>
      %cst_17 = arith.constant 2.000000e-01 : f32
      %19 = vector.broadcast %cst_17 : f32 to vector<8x128xf32>
      %20 = arith.mulf %19, %18 : vector<8x128xf32>
      %21 = arith.maximumf %18, %20 : vector<8x128xf32>
      %c0_18 = arith.constant 0 : index
      %c0_19 = arith.constant 0 : index
      %22 = vector.load %arg5[%c0_18, %c0_19] : memref<128x128xf32, #tpu.memory_space<vmem>>, vector<128x128xf32>
      %cst_20 = arith.constant dense<0.000000e+00> : vector<8x128xf32>
      %23 = tpu.matmul %21, %22, %cst_20 {dimension_numbers = #tpu.dot_dimension_numbers<[1], [0], [0], [1], [0, 0, 1, 1], [], []>} : vector<8x128xf32>, vector<128x128xf32>, vector<8x128xf32> -> vector<8x128xf32>
      %c0_21 = arith.constant 0 : index
      %c0_22 = arith.constant 0 : index
      %24 = vector.load %arg6[%c0_21, %c0_22] : memref<1x128xf32, #tpu.memory_space<vmem>>, vector<1x128xf32>
      %25 = vector.broadcast %24 : vector<1x128xf32> to vector<8x128xf32>
      %26 = arith.addf %23, %25 : vector<8x128xf32>
      %c0_23 = arith.constant 0 : index
      %c0_24 = arith.constant 0 : index
      %27 = vector.load %arg7[%c0_23, %c0_24] : memref<8x128xf32, #tpu.memory_space<vmem>>, vector<8x128xf32>
      tpu.vector_store %arg7[%c0_23, %c0_24], %26 {strides = array<i32>} : memref<8x128xf32, #tpu.memory_space<vmem>>, vector<8x128xf32>,
    } else {
    }
    return
  }
  func.func @transform_0(%arg0: i32, %arg1: i32) -> (i32, i32, i32) {
    %c0_i32 = arith.constant 0 : i32
    %c0_i32_0 = arith.constant 0 : i32
    return %arg0, %arg1, %c0_i32 : i32, i32, i32
  }
  func.func @transform_1(%arg0: i32, %arg1: i32) -> (i32, i32) {
    %c0_i32 = arith.constant 0 : i32
    %c0_i32_0 = arith.constant 0 : i32
    %c0_i32_1 = arith.constant 0 : i32
    return %c0_i32, %c0_i32_0 : i32, i32
  }
  func.func @transform_2(%arg0: i32, %arg1: i32) -> (i32, i32) {
    %c0_i32 = arith.constant 0 : i32
    %c0_i32_0 = arith.constant 0 : i32
    %c0_i32_1 = arith.constant 0 : i32
    return %c0_i32, %c0_i32_0 : i32, i32
  }
  func.func @transform_3(%arg0: i32, %arg1: i32) -> (i32, i32) {
    %c0_i32 = arith.constant 0 : i32
    %c0_i32_0 = arith.constant 0 : i32
    %c0_i32_1 = arith.constant 0 : i32
    return %c0_i32, %c0_i32_0 : i32, i32
  }
  func.func @transform_4(%arg0: i32, %arg1: i32) -> (i32, i32) {
    %c0_i32 = arith.constant 0 : i32
    %c0_i32_0 = arith.constant 0 : i32
    %c0_i32_1 = arith.constant 0 : i32
    return %c0_i32, %c0_i32_0 : i32, i32
  }
  func.func @transform_5(%arg0: i32, %arg1: i32) -> (i32, i32) {
    %c0_i32 = arith.constant 0 : i32
    %c0_i32_0 = arith.constant 0 : i32
    return %arg0, %c0_i32 : i32, i32
  }
}

</mosaic_0001>

<llo_original>
// kernel: tpu_custom_call.1
$region0: #{tpu_custom_call.1}
  #allocation0 [shape = 'u32[]', space=smem, size = 0x4, offset = 0x4, fixed_abs, tag = 'smem constant byte address 0x4 - core index']
  #allocation1 [shape = 'u32[72,128]{1,0:T(1,128)}', space=vmem, size = 0x9000, scoped, tag = 'internal scratch']
  #allocation2 [shape = 'f32[8,32]{1,0:T(8,128)}', space=vmem, size = 0x1000, scoped, tag = 'scratch operand']
  %s0 = inlined_call_operand.hbm [shape: f32[2,8,32], index: 0, kind: input, shape index: {}]
  %s1 = inlined_call_operand.hbm [shape: f32[32,128], index: 1, kind: input, shape index: {}]
  %s2 = inlined_call_operand.vmem [shape: f32[1,128], index: 2, kind: input, shape index: {}]
  %s3 = inlined_call_operand.hbm [shape: f32[128,128], index: 3, kind: input, shape index: {}]
  %s4 = inlined_call_operand.vmem [shape: f32[1,128], index: 4, kind: input, shape index: {}]
  %s5 = inlined_call_operand.hbm [shape: f32[2,128], index: 5, kind: output, shape index: {}]
  %s6 = sld [smem:[#allocation0]]
  $region50: #{tpu_custom_call.1} parent=0
    _
  %s8 = ssub.s32 1, %s6
  %s9 = scalar_select 0, %s8, %s6
  $region1: #{tpu_custom_call.1} parent=0
    #allocation3 [shape = 'u8[32768]{0}', space=vmem, size = 0x8000, scoped, tag = 'input window, operand 0, single buffered']
    #allocation4 [shape = 's32[1]{0}', space=sflag, size = 0x4, scoped, tag = 'scoped memory for tpu_custom_call.1']
    #allocation5 [shape = 's32[1]{0}', space=sflag, size = 0x4, scoped, tag = 'scoped memory for tpu_custom_call.1']
    #allocation6 [shape = 'u8[16384]{0}', space=vmem, size = 0x4000, scoped, tag = 'input window, operand 1, single buffered']
    #allocation7 [shape = 's32[1]{0}', space=sflag, size = 0x4, scoped, tag = 'scoped memory for tpu_custom_call.1']
    #allocation8 [shape = 'u8[65536]{0}', space=vmem, size = 0x10000, scoped, tag = 'input window, operand 3, single buffered']
    #allocation9 [shape = 'u8[4096]{0}', space=vmem, size = 0x1000, scoped, tag = 'output window, operand 0, single buffered']
    %10 = vsyncpa [#allocation4], 0
    %11 = vsyncpa [#allocation7], 0
    %12 = vsyncpa [#allocation5], 0
    // Predicated region
    $region2: #{tpu_custom_call.1} parent=1 // pred_check
      _
    $region3: #{tpu_custom_call.1} parent=1 // pred_check_branch
      %14 = sbr.rel (0) target = $region5
    $region4: #{tpu_custom_call.1} parent=1 // pred_region
      %16 = vsyncadd [#allocation4], 768
      %s17 = sshll.u32 %s0, 4
      %s18 = int_to_ptr.hbm [resolvable:$true] %s17
      %s19 = sshll.u32 [#allocation3], 4
      %s20 = int_to_ptr.vmem [resolvable:$true] %s19
      %25 = dma.hbm_to_vmem [thread:$0]  %s18, 256, %s20, [#allocation4], 128, 128, 8
    $region5: #{tpu_custom_call.1} parent=1 // pred_fallthru
      _
    // Predicated region
    $region6: #{tpu_custom_call.1} parent=1 // pred_check
      _
    $region7: #{tpu_custom_call.1} parent=1 // pred_check_branch
      %27 = sbr.rel (0) target = $region9
    $region8: #{tpu_custom_call.1} parent=1 // pred_region
      %29 = vsyncadd [#allocation7], 0
      %s30 = sshll.u32 %s1, 4
      %s31 = int_to_ptr.hbm [resolvable:$true] %s30
      %s32 = sshll.u32 [#allocation6], 4
      %s33 = int_to_ptr.vmem [resolvable:$true] %s32
      %38 = dma.hbm_to_vmem [thread:$0]  %s31, 512, %s33, [#allocation7], 128, 128, 8
    $region9: #{tpu_custom_call.1} parent=1 // pred_fallthru
      _
    // Predicated region
    $region10: #{tpu_custom_call.1} parent=1 // pred_check
      _
    $region11: #{tpu_custom_call.1} parent=1 // pred_check_branch
      %40 = sbr.rel (0) target = $region13
    $region12: #{tpu_custom_call.1} parent=1 // pred_region
      _
    $region13: #{tpu_custom_call.1} parent=1 // pred_fallthru
      _
    // Predicated region
    $region14: #{tpu_custom_call.1} parent=1 // pred_check
      _
    $region15: #{tpu_custom_call.1} parent=1 // pred_check_branch
      %42 = sbr.rel (0) target = $region17
    $region16: #{tpu_custom_call.1} parent=1 // pred_region
      %44 = vsyncadd [#allocation7], 0
      %s45 = sshll.u32 %s3, 4
      %s46 = int_to_ptr.hbm [resolvable:$true] %s45
      %s47 = sshll.u32 [#allocation8], 4
      %s48 = int_to_ptr.vmem [resolvable:$true] %s47
      %53 = dma.hbm_to_vmem [thread:$0]  %s46, 2048, %s48, [#allocation7], 128, 128, 8
    $region17: #{tpu_custom_call.1} parent=1 // pred_fallthru
      _
    // Predicated region
    $region18: #{tpu_custom_call.1} parent=1 // pred_check
      _
    $region19: #{tpu_custom_call.1} parent=1 // pred_check_branch
      %55 = sbr.rel (0) target = $region21
    $region20: #{tpu_custom_call.1} parent=1 // pred_region
      _
    $region21: #{tpu_custom_call.1} parent=1 // pred_fallthru
      _
    // Predicated region
    $region22: #{tpu_custom_call.1} parent=1 // pred_check
      _
    $region23: #{tpu_custom_call.1} parent=1 // pred_check_branch
      %57 = sbr.rel (0) target = $region25
    $region24: #{tpu_custom_call.1} parent=1 // pred_region
      %59 = dma.done [#allocation4], 1024
    $region25: #{tpu_custom_call.1} parent=1 // pred_fallthru
      _
    // Predicated region
    $region26: #{tpu_custom_call.1} parent=1 // pred_check
      _
    $region27: #{tpu_custom_call.1} parent=1 // pred_check_branch
      %61 = sbr.rel (0) target = $region29
    $region28: #{tpu_custom_call.1} parent=1 // pred_region
      %63 = dma.done [#allocation7], 512
    $region29: #{tpu_custom_call.1} parent=1 // pred_fallthru
      _
    // Predicated region
    $region30: #{tpu_custom_call.1} parent=1 // pred_check
      _
    $region31: #{tpu_custom_call.1} parent=1 // pred_check_branch
      %65 = sbr.rel (0) target = $region33
    $region32: #{tpu_custom_call.1} parent=1 // pred_region
      %67 = dma.done [#allocation7], 2048
    $region33: #{tpu_custom_call.1} parent=1 // pred_fallthru
      _
    %p68 = scmp.eq.s32.totalorder 0, 0
    // Predicated region
    $region34: #{tpu_custom_call.1} parent=1 // pred_check
      %p69 = pneg %p68
    $region35: #{tpu_custom_call.1} parent=1 // pred_check_branch
      %71 = sbr.rel (%p69) target = $region37
    $region36: #{tpu_custom_call.1} parent=1 // pred_region
      %vm72 = vcmask 261120
      %73 = vst.msk [vmem:[#allocation2] sm:$0xff] %vm72, 0.0
    $region37: #{tpu_custom_call.1} parent=1 // pred_fallthru
      _
    %v74 = vld [vmem:[#allocation3] sm:$0xff]
    %v75 = vld [vmem:[#allocation3 + $0x8] sm:$0xff]
    %v76 = vld [vmem:[#allocation3 + $0x10] sm:$0xff]
    %v77 = vld [vmem:[#allocation3 + $0x18] sm:$0xff]
    %v78 = vld [vmem:[#allocation3 + $0x20] sm:$0xff]
    %v79 = vld [vmem:[#allocation3 + $0x28] sm:$0xff]
    %v80 = vld [vmem:[#allocation3 + $0x30] sm:$0xff]
    %v81 = vld [vmem:[#allocation3 + $0x38] sm:$0xff]
    %v82 = vld [vmem:[#allocation2] sm:$0xff]
    %vm83 = vcmask 261120
    %v84 = vsel %vm83, %v74, 0.0
    %v85 = vrot.slane %v84, 4
    %v86 = vadd.f32 %v84, %v85
    %v87 = vrot.slane %v86, 2
    %v88 = vadd.f32 %v86, %v87
    %v89 = vrot.slane %v88, 1
    %v90 = vadd.f32 %v88, %v89
    %v91 = vsel %vm83, %v75, 0.0
    %v92 = vrot.slane %v91, 4
    %v93 = vadd.f32 %v91, %v92
    %v94 = vrot.slane %v93, 2
    %v95 = vadd.f32 %v93, %v94
    %v96 = vrot.slane %v95, 1
    %v97 = vadd.f32 %v95, %v96
    %v98 = vsel %vm83, %v76, 0.0
    %v99 = vrot.slane %v98, 4
    %v100 = vadd.f32 %v98, %v99
    %v101 = vrot.slane %v100, 2
    %v102 = vadd.f32 %v100, %v101
    %v103 = vrot.slane %v102, 1
    %v104 = vadd.f32 %v102, %v103
    %v105 = vsel %vm83, %v77, 0.0
    %v106 = vrot.slane %v105, 4
    %v107 = vadd.f32 %v105, %v106
    %v108 = vrot.slane %v107, 2
    %v109 = vadd.f32 %v107, %v108
    %v110 = vrot.slane %v109, 1
    %v111 = vadd.f32 %v109, %v110
    %v112 = vsel %vm83, %v78, 0.0
    %v113 = vrot.slane %v112, 4
    %v114 = vadd.f32 %v112, %v113
    %v115 = vrot.slane %v114, 2
    %v116 = vadd.f32 %v114, %v115
    %v117 = vrot.slane %v116, 1
    %v118 = vadd.f32 %v116, %v117
    %v119 = vsel %vm83, %v79, 0.0
    %v120 = vrot.slane %v119, 4
    %v121 = vadd.f32 %v119, %v120
    %v122 = vrot.slane %v121, 2
    %v123 = vadd.f32 %v121, %v122
    %v124 = vrot.slane %v123, 1
    %v125 = vadd.f32 %v123, %v124
    %v126 = vsel %vm83, %v80, 0.0
    %v127 = vrot.slane %v126, 4
    %v128 = vadd.f32 %v126, %v127
    %v129 = vrot.slane %v128, 2
    %v130 = vadd.f32 %v128, %v129
    %v131 = vrot.slane %v130, 1
    %v132 = vadd.f32 %v130, %v131
    %v133 = vsel %vm83, %v81, 0.0
    %v134 = vrot.slane %v133, 4
    %v135 = vadd.f32 %v133, %v134
    %v136 = vrot.slane %v135, 2
    %v137 = vadd.f32 %v135, %v136
    %v138 = vrot.slane %v137, 1
    %v139 = vadd.f32 %v137, %v138
    %vm148 = vcmask 1041409
    %v149 = vsel %vm148, %v97, %v90
    %vm150 = vcmask 1042434
    %v151 = vsel %vm150, %v104, %v149
    %vm152 = vcmask 1043459
    %v153 = vsel %vm152, %v111, %v151
    %vm154 = vcmask 1044484
    %v155 = vsel %vm154, %v118, %v153
    %vm156 = vcmask 1045509
    %v157 = vsel %vm156, %v125, %v155
    %vm158 = vcmask 1046534
    %v159 = vsel %vm158, %v132, %v157
    %vm160 = vcmask 1047559
    %v161 = vsel %vm160, %v139, %v159
    %v163 = vadd.f32 %v82, %v161
    %164 = vst.msk [vmem:[#allocation2] sm:$0xff] %vm83, %v163
    // Predicated region
    $region38: #{tpu_custom_call.1} parent=1 // pred_check
      %p165 = pneg %p68
    $region39: #{tpu_custom_call.1} parent=1 // pred_check_branch
      %167 = sbr.rel (%p165) target = $region41
    $region40: #{tpu_custom_call.1} parent=1 // pred_region
      %v168 = vld [vmem:[#allocation2] sm:$0xff]
      %v169 = vmul.f32 %v168, 0.125
      %v170 = vld [vmem:[#allocation6] sm:$0xff]
      %v171 = vld [vmem:[#allocation6 + $0x8] sm:$0xff]
      %v172 = vld [vmem:[#allocation6 + $0x10] sm:$0xff]
      %v173 = vld [vmem:[#allocation6 + $0x18] sm:$0xff]
      %v174 = vld [vmem:[%s2] sm:$0x1]
      %v176 = vperm.slane %v174, 0
      %v179 = vsel %vm83, %v169, 0
      %181 = vmatpush.msra.mxu0 0.0
      %182 = vmatpush.msra.mxu0 0.0
      %183 = vmatpush.msra.mxu0 0.0
      %184 = vmatpush.msra.mxu0 0.0
      %185 = vmatpush.msra.mxu0 0.0
      %186 = vmatpush.msra.mxu0 0.0
      %187 = vmatpush.msra.mxu0 0.0
      %188 = vmatpush.msra.mxu0 0.0
      %189 = vmatpush.msra.mxu0 0.0
      %190 = vmatpush.msra.mxu0 0.0
      %191 = vmatpush.msra.mxu0 0.0
      %192 = vmatpush.msra.mxu0 0.0
      %193 = vmatpush.msra.mxu0 %v173
      %194 = vmatpush.msra.mxu0 %v172
      %195 = vmatpush.msra.mxu0 %v171
      %196 = vmatpush.msra.mxu0 %v170
      %197 = vmatmul.f32.gmra.mxu0 %v179
      %v198 = vpop.f32.mrf.mxu0
      %v199 = vadd.f32 %v176, %v198
      %200 = vdwg.mxu0
      %v201 = vmul.f32 %v199, 0.2
      %v202 = vmax.f32 %v199, %v201
      %v203 = vld [vmem:[#allocation8] sm:$0xff]
      %v204 = vld [vmem:[#allocation8 + $0x8] sm:$0xff]
      %v205 = vld [vmem:[#allocation8 + $0x10] sm:$0xff]
      %v206 = vld [vmem:[#allocation8 + $0x18] sm:$0xff]
      %v207 = vld [vmem:[#allocation8 + $0x20] sm:$0xff]
      %v208 = vld [vmem:[#allocation8 + $0x28] sm:$0xff]
      %v209 = vld [vmem:[#allocation8 + $0x30] sm:$0xff]
      %v210 = vld [vmem:[#allocation8 + $0x38] sm:$0xff]
      %v211 = vld [vmem:[#allocation8 + $0x40] sm:$0xff]
      %v212 = vld [vmem:[#allocation8 + $0x48] sm:$0xff]
      %v213 = vld [vmem:[#allocation8 + $0x50] sm:$0xff]
      %v214 = vld [vmem:[#allocation8 + $0x58] sm:$0xff]
      %v215 = vld [vmem:[#allocation8 + $0x60] sm:$0xff]
      %v216 = vld [vmem:[#allocation8 + $0x68] sm:$0xff]
      %v217 = vld [vmem:[#allocation8 + $0x70] sm:$0xff]
      %v218 = vld [vmem:[#allocation8 + $0x78] sm:$0xff]
      %v219 = vld [vmem:[%s4] sm:$0x1]
      %v221 = vperm.slane %v219, 0
      %223 = vmatpush.msra.mxu0 %v218
      %224 = vmatpush.msra.mxu0 %v217
      %225 = vmatpush.msra.mxu0 %v216
      %226 = vmatpush.msra.mxu0 %v215
      %227 = vmatpush.msra.mxu0 %v214
      %228 = vmatpush.msra.mxu0 %v213
      %229 = vmatpush.msra.mxu0 %v212
      %230 = vmatpush.msra.mxu0 %v211
      %231 = vmatpush.msra.mxu0 %v210
      %232 = vmatpush.msra.mxu0 %v209
      %233 = vmatpush.msra.mxu0 %v208
      %234 = vmatpush.msra.mxu0 %v207
      %235 = vmatpush.msra.mxu0 %v206
      %236 = vmatpush.msra.mxu0 %v205
      %237 = vmatpush.msra.mxu0 %v204
      %238 = vmatpush.msra.mxu0 %v203
      %239 = vmatmul.f32.gmra.mxu0 %v202
      %v240 = vpop.f32.mrf.mxu0
      %v241 = vadd.f32 %v221, %v240
      %242 = vdwg.mxu0
      %243 = vst [vmem:[#allocation9] sm:$0xff] %v241
    $region41: #{tpu_custom_call.1} parent=1 // pred_fallthru
      _
    // Predicated region
    $region42: #{tpu_custom_call.1} parent=1 // pred_check
      _
    $region43: #{tpu_custom_call.1} parent=1 // pred_check_branch
      %245 = sbr.rel (0) target = $region45
    $region44: #{tpu_custom_call.1} parent=1 // pred_region
      %247 = vsyncadd [#allocation5], 96
      %s248 = sshll.u32 [#allocation9], 4
      %s249 = int_to_ptr.vmem [resolvable:$true] %s248
      %s250 = sshll.u32 %s5, 4
      %s251 = int_to_ptr.hbm [resolvable:$true] %s250
      %256 = dma.vmem_to_hbm [thread:$0]  %s249, 32, %s251, [#allocation5], 32, 32, 2
    $region45: #{tpu_custom_call.1} parent=1 // pred_fallthru
      _
    // Predicated region
    $region46: #{tpu_custom_call.1} parent=1 // pred_check
      _
    $region47: #{tpu_custom_call.1} parent=1 // pred_check_branch
      %258 = sbr.rel (0) target = $region49
    $region48: #{tpu_custom_call.1} parent=1 // pred_region
      %260 = dma.done [#allocation5], 128
    $region49: #{tpu_custom_call.1} parent=1 // pred_fallthru
      _
    %261 = vsyncpa [#allocation4], 1
    %262 = vsyncpa [#allocation7], 1
    %263 = vsyncpa [#allocation5], 1

</llo_original>
